<compile_context>
chip_gen: v6e
topology: v6e:2x2x1
jax: 0.10.0
libtpu: 0.0.40
codegen_flags: <defaults>
</compile_context>

<pallas_src>
import jax
import jax.numpy as jnp
from jax.experimental import pallas as pl
from jax.experimental.pallas import tpu as pltpu


def _round_up(x, m):
    return (x + m - 1) // m * m


def _spmm_kernel(kidx_ref, cnt_ref, adj_ref, emb_ref, out_ref):
    """Block-sparse tiled matmul: out[i, j] = sum_k adj[i, k] @ emb[k, j].

    kidx_ref: SMEM [nib, nkb] int32 - per row-block list of nonzero k-block ids
              (padded positions repeat the last valid id -> no re-DMA).
    cnt_ref : SMEM [nib]      int32 - number of valid entries per row-block.
    """
    i = pl.program_id(0)
    k = pl.program_id(2)

    # Output block is resident across the k axis: init once, accumulate in place.
    @pl.when(k == 0)
    def _():
        out_ref[...] = jnp.zeros_like(out_ref)

    # Skip the MXU work for padded (all-zero) k-steps of this row-block.
    @pl.when(k < cnt_ref[i])
    def _():
        out_ref[...] += jnp.dot(
            adj_ref[...], emb_ref[...], preferred_element_type=jnp.float32
        )


def gcn_layer(adj, embeds, *, tm=None, tk=None, tn=None,
              compute_dtype=jnp.bfloat16):
    """out = adj @ embeds  (dense-storage equivalent of torch.spmm).

    Returns float32 [N, D]; adj/embeds are cast to `compute_dtype` (bf16 by
    default) for the MXU, accumulation stays in f32.
    """
    M, K = adj.shape
    K2, D = embeds.shape
    assert K == K2, "inner dims must match"

    # Adaptive tiles: multiples of 128 (feed the 256-wide MXUs on v6e/v7x when
    # the problem is big enough), capped so double-buffered VMEM stays far
    # below 64 MiB (v7x) — 256x512 bf16 adj tile ≈ 256 KiB.
    if tm is None:
        tm = min(_round_up(M, 128), 256)
    if tk is None:
        tk = min(_round_up(K, 128), 512)
    if tn is None:
        tn = min(_round_up(D, 128), 256)

    Mp, Kp, Dp = _round_up(M, tm), _round_up(K, tk), _round_up(D, tn)

    adj_c = adj.astype(compute_dtype)
    emb_c = embeds.astype(compute_dtype)
    adj_p = jnp.pad(adj_c, ((0, Mp - M), (0, Kp - K)))
    emb_p = jnp.pad(emb_c, ((0, Kp - K), (0, Dp - D)))

    nib, njb, nkb = Mp // tm, Dp // tn, Kp // tk

    # ---- block-sparsity metadata (computed in plain JAX on the host side) ----
    blocks = adj_p.reshape(nib, tm, nkb, tk)
    nz = jnp.any(blocks != 0, axis=(1, 3))                       # [nib, nkb] bool
    counts = nz.sum(axis=1).astype(jnp.int32)                    # [nib]
    pos = jnp.arange(nkb, dtype=jnp.int32)
    # Nonzero block ids first (ascending), zero block ids after.
    order = jnp.argsort(jnp.where(nz, pos[None, :], pos[None, :] + nkb),
                        axis=1).astype(jnp.int32)
    # Padded slots repeat the last valid id so consecutive grid steps keep the
    # same block index and Pallas skips the DMA.
    last = jnp.take_along_axis(order,
                               jnp.maximum(counts - 1, 0)[:, None], axis=1)
    kidx = jnp.where(pos[None, :] < counts[:, None], order, last).astype(jnp.int32)

    out_p = pl.pallas_call(
        _spmm_kernel,
        out_shape=jax.ShapeDtypeStruct((Mp, Dp), jnp.float32),
        grid_spec=pltpu.PrefetchScalarGridSpec(
            num_scalar_prefetch=2,
            grid=(nib, njb, nkb),
            in_specs=[
                # adj tile: row-block i, k-th *nonzero* k-block of that row.
                pl.BlockSpec((tm, tk),
                             lambda i, j, k, kidx_ref, cnt_ref:
                             (i, kidx_ref[i, k])),
                # embeds tile: matching k-block, feature block j.
                pl.BlockSpec((tk, tn),
                             lambda i, j, k, kidx_ref, cnt_ref:
                             (kidx_ref[i, k], j)),
            ],
            out_specs=pl.BlockSpec((tm, tn),
                                   lambda i, j, k, kidx_ref, cnt_ref: (i, j)),
        ),
        compiler_params=pltpu.CompilerParams(
            dimension_semantics=("parallel", "parallel", "arbitrary")
        ),
    )(kidx, counts, adj_p, emb_p)

    return out_p[:M, :D]


if __name__ == "__main__":
    key = jax.random.PRNGKey(0)
    k_adj, k_mask, k_emb = jax.random.split(key, 3)

    N_NODES = 256   # number of graph nodes
    D_FEAT = 128    # embedding dim

    # Synthetic dense representation of a sparse adjacency: ~10% nonzeros,
    # row-normalized like a typical GCN propagation matrix.
    vals = jax.random.uniform(k_adj, (N_NODES, N_NODES), dtype=jnp.float32)
    mask = (jax.random.uniform(k_mask, (N_NODES, N_NODES)) < 0.1).astype(jnp.float32)
    adj = vals * mask
    row_sum = jnp.maximum(adj.sum(axis=1, keepdims=True), 1e-6)
    adj = adj / row_sum

    embeds = jax.random.normal(k_emb, (N_NODES, D_FEAT), dtype=jnp.float32)

    out = gcn_layer(adj, embeds)
    out = jax.block_until_ready(out)
    assert out.shape == (N_NODES, D_FEAT)

    # Reference with the same bf16 input rounding + f32 accumulation.
    ref_bf16 = jnp.dot(adj.astype(jnp.bfloat16), embeds.astype(jnp.bfloat16),
                       preferred_element_type=jnp.float32)
    assert jnp.allclose(out, ref_bf16, atol=1e-2, rtol=1e-2)

    # Loose sanity check against the exact f32 torch.spmm semantics.
    ref_f32 = adj @ embeds
    assert jnp.allclose(out, ref_f32, atol=5e-2, rtol=5e-2)

    print("KERNEL_OK")
</pallas_src>

<mosaic_0001>
module attributes {stable_mosaic.version = 11 : i64} {
  func.func @_spmm_kernel(%arg0: i32, %arg1: i32, %arg2: i32, %arg3: memref<1x1xi32, #tpu.memory_space<smem>>, %arg4: memref<1xi32, #tpu.memory_space<smem>>, %arg5: memref<256x256xbf16, #tpu.memory_space<vmem>>, %arg6: memref<256x128xbf16, #tpu.memory_space<vmem>>, %arg7: memref<256x128xf32, #tpu.memory_space<vmem>>) attributes {dimension_semantics = [#tpu.dimension_semantics<parallel>, #tpu.dimension_semantics<parallel>, #tpu.dimension_semantics<arbitrary>], iteration_bounds = array<i64: 1, 1, 1>, scalar_prefetch = 2 : i64, scratch_operands = 0 : i64, tpu.core_type = #tpu.core_type<tc>, window_params = [{transform_indices = @transform_0, window_bounds = array<i64: 256, 256>}, {transform_indices = @transform_1, window_bounds = array<i64: 256, 128>}, {transform_indices = @transform_2, window_bounds = array<i64: 256, 128>}]} {
    %c0_i32 = arith.constant 0 : i32
    %0 = arith.cmpi eq, %arg2, %c0_i32 : i32
    %1 = arith.extui %0 : i1 to i32
    %c0_i32_0 = arith.constant 0 : i32
    %2 = arith.cmpi ne, %1, %c0_i32_0 : i32
    scf.if %2 {
      %cst = arith.constant 0.000000e+00 : f32
      %8 = vector.broadcast %cst : f32 to vector<256x128xf32>
      %c0 = arith.constant 0 : index
      %c0_2 = arith.constant 0 : index
      %9 = vector.load %arg7[%c0, %c0_2] : memref<256x128xf32, #tpu.memory_space<vmem>>, vector<256x128xf32>
      tpu.vector_store %arg7[%c0, %c0_2], %8 {strides = array<i32>} : memref<256x128xf32, #tpu.memory_space<vmem>>, vector<256x128xf32>,
    } else {
    }
    %3 = arith.index_cast %arg0 : i32 to index
    %4 = memref.load %arg4[%3] : memref<1xi32, #tpu.memory_space<smem>>
    %5 = arith.cmpi slt, %arg2, %4 : i32
    %6 = arith.extui %5 : i1 to i32
    %c0_i32_1 = arith.constant 0 : i32
    %7 = arith.cmpi ne, %6, %c0_i32_1 : i32
    scf.if %7 {
      %c0 = arith.constant 0 : index
      %c0_2 = arith.constant 0 : index
      %8 = vector.load %arg7[%c0, %c0_2] : memref<256x128xf32, #tpu.memory_space<vmem>>, vector<256x128xf32>
      %c0_3 = arith.constant 0 : index
      %c0_4 = arith.constant 0 : index
      %9 = vector.load %arg5[%c0_3, %c0_4] : memref<256x256xbf16, #tpu.memory_space<vmem>>, vector<256x256xbf16>
      %c0_5 = arith.constant 0 : index
      %c0_6 = arith.constant 0 : index
      %10 = vector.load %arg6[%c0_5, %c0_6] : memref<256x128xbf16, #tpu.memory_space<vmem>>, vector<256x128xbf16>
      %cst = arith.constant dense<0.000000e+00> : vector<256x128xf32>
      %11 = tpu.matmul %9, %10, %cst {dimension_numbers = #tpu.dot_dimension_numbers<[1], [0], [0], [1], [0, 0, 1, 1], [], []>} : vector<256x256xbf16>, vector<256x128xbf16>, vector<256x128xf32> -> vector<256x128xf32>
      %12 = arith.addf %8, %11 : vector<256x128xf32>
      %c0_7 = arith.constant 0 : index
      %c0_8 = arith.constant 0 : index
      %13 = vector.load %arg7[%c0_7, %c0_8] : memref<256x128xf32, #tpu.memory_space<vmem>>, vector<256x128xf32>
      tpu.vector_store %arg7[%c0_7, %c0_8], %12 {strides = array<i32>} : memref<256x128xf32, #tpu.memory_space<vmem>>, vector<256x128xf32>,
    } else {
    }
    return
  }
  func.func @transform_0(%arg0: i32, %arg1: i32, %arg2: i32, %arg3: memref<1x1xi32, #tpu.memory_space<smem>>, %arg4: memref<1xi32, #tpu.memory_space<smem>>) -> (i32, i32) {
    %0 = arith.index_cast %arg0 : i32 to index
    %1 = arith.index_cast %arg2 : i32 to index
    %2 = memref.load %arg3[%0, %1] : memref<1x1xi32, #tpu.memory_space<smem>>
    %c0_i32 = arith.constant 0 : i32
    return %arg0, %2 : i32, i32
  }
  func.func @transform_1(%arg0: i32, %arg1: i32, %arg2: i32, %arg3: memref<1x1xi32, #tpu.memory_space<smem>>, %arg4: memref<1xi32, #tpu.memory_space<smem>>) -> (i32, i32) {
    %0 = arith.index_cast %arg0 : i32 to index
    %1 = arith.index_cast %arg2 : i32 to index
    %2 = memref.load %arg3[%0, %1] : memref<1x1xi32, #tpu.memory_space<smem>>
    %c0_i32 = arith.constant 0 : i32
    return %2, %arg1 : i32, i32
  }
  func.func @transform_2(%arg0: i32, %arg1: i32, %arg2: i32, %arg3: memref<1x1xi32, #tpu.memory_space<smem>>, %arg4: memref<1xi32, #tpu.memory_space<smem>>) -> (i32, i32) {
    %c0_i32 = arith.constant 0 : i32
    return %arg0, %arg1 : i32, i32
  }
}

</mosaic_0001>

<llo_original>
// kernel: tpu_custom_call.1
$region0: #{tpu_custom_call.1}
  #allocation0 [shape = 'u32[]', space=smem, size = 0x4, offset = 0x4, fixed_abs, tag = 'smem constant byte address 0x4 - core index']
  #allocation1 [shape = 'u32[144,128]{1,0:T(1,128)}', space=vmem, size = 0x12000, scoped, tag = 'internal scratch']
  #allocation2 [shape = 's32[1]{0}', space=sflag, size = 0x4, scoped, tag = 'scoped memory for tpu_custom_call.1']
  #allocation3 [shape = 's32[1,1]{1,0:T(1,128)S(6)}', space=smem, size = 0x200, scoped, tag = 'prefetched SMEM operand 0']
  #allocation4 [shape = 's32[1]{0:T(128)S(6)}', space=smem, size = 0x200, scoped, tag = 'prefetched SMEM operand 1']
  %s0 = inlined_call_operand.<no memory space> [shape: s32[1,1], index: 0, kind: input, shape index: {}]
  %s1 = inlined_call_operand.<no memory space> [shape: s32[1], index: 1, kind: input, shape index: {}]
  %s2 = inlined_call_operand.hbm [shape: bf16[256,256], index: 2, kind: input, shape index: {}]
  %s3 = inlined_call_operand.hbm [shape: bf16[256,128], index: 3, kind: input, shape index: {}]
  %s4 = inlined_call_operand.hbm [shape: f32[256,128], index: 4, kind: output, shape index: {}]
  %s5 = sld [smem:[#allocation0]]
  $region34: #{tpu_custom_call.1} parent=0
    _
  %s7 = ssub.s32 1, %s5
  %s8 = scalar_select 0, %s7, %s5
  %9 = sst [smem:[#allocation3]] %s0
  %10 = sst [smem:[#allocation4]] %s1
  $region1: #{tpu_custom_call.1} parent=0
    #allocation5 [shape = 'u8[131072]{0}', space=vmem, size = 0x20000, scoped, tag = 'input window, operand 2, single buffered']
    #allocation6 [shape = 's32[1]{0}', space=sflag, size = 0x4, scoped, tag = 'scoped memory for tpu_custom_call.1']
    #allocation7 [shape = 's32[1]{0}', space=sflag, size = 0x4, scoped, tag = 'scoped memory for tpu_custom_call.1']
    #allocation8 [shape = 'u8[65536]{0}', space=vmem, size = 0x10000, scoped, tag = 'input window, operand 3, single buffered']
    #allocation9 [shape = 's32[1]{0}', space=sflag, size = 0x4, scoped, tag = 'scoped memory for tpu_custom_call.1']
    #allocation10 [shape = 'u8[131072]{0}', space=vmem, size = 0x20000, scoped, tag = 'output window, operand 0, single buffered']
    %11 = vsyncpa [#allocation6], 0
    %12 = vsyncpa [#allocation9], 0
    %13 = vsyncpa [#allocation7], 0
    // Predicated region
    $region2: #{tpu_custom_call.1} parent=1 // pred_check
      _
    $region3: #{tpu_custom_call.1} parent=1 // pred_check_branch
      %15 = sbr.rel (0) target = $region5
    $region4: #{tpu_custom_call.1} parent=1 // pred_region
      %s16 = sadd.s32 0, 0
      %s17 = smul.u32 %s16, 128
      %s18 = sadd.s32 %s17, 0
      %s19 = sld [smem:[#allocation3 + %s18]]
      %s20 = smul.u32 2, %s19
      %s22 = ssub.s32 4096, 4096
      %23 = vsyncadd [#allocation6], %s22
      %s24 = smul.addr %s20, 64
      %s25 = scalar_lea.hbm %s2, %s24
      %s26 = sshll.u32 [#allocation5], 4
      %s27 = int_to_ptr.vmem [resolvable:$true] %s26
      %32 = dma.hbm_to_vmem [thread:$0]  %s25, 4096, %s27, [#allocation6], 128, 128, 8
    $region5: #{tpu_custom_call.1} parent=1 // pred_fallthru
      _
    // Predicated region
    $region6: #{tpu_custom_call.1} parent=1 // pred_check
      _
    $region7: #{tpu_custom_call.1} parent=1 // pred_check_branch
      %34 = sbr.rel (0) target = $region9
    $region8: #{tpu_custom_call.1} parent=1 // pred_region
      %s35 = sadd.s32 0, 0
      %s36 = smul.u32 %s35, 128
      %s37 = sadd.s32 %s36, 0
      %s38 = sld [smem:[#allocation3 + %s37]]
      %s39 = smul.u32 32, %s38
      %s41 = ssub.s32 2048, 2048
      %42 = vsyncadd [#allocation9], %s41
      %s43 = smul.addr %s39, 64
      %s44 = scalar_lea.hbm %s3, %s43
      %s45 = sshll.u32 [#allocation8], 4
      %s46 = int_to_ptr.vmem [resolvable:$true] %s45
      %51 = dma.hbm_to_vmem [thread:$0]  %s44, 2048, %s46, [#allocation9], 64, 64, 4
    $region9: #{tpu_custom_call.1} parent=1 // pred_fallthru
      _
    // Predicated region
    $region10: #{tpu_custom_call.1} parent=1 // pred_check
      _
    $region11: #{tpu_custom_call.1} parent=1 // pred_check_branch
      %53 = sbr.rel (0) target = $region13
    $region12: #{tpu_custom_call.1} parent=1 // pred_region
      %54 = dma.done [#allocation6], 4096
    $region13: #{tpu_custom_call.1} parent=1 // pred_fallthru
      _
    // Predicated region
    $region14: #{tpu_custom_call.1} parent=1 // pred_check
      _
    $region15: #{tpu_custom_call.1} parent=1 // pred_check_branch
      %56 = sbr.rel (0) target = $region17
    $region16: #{tpu_custom_call.1} parent=1 // pred_region
      %57 = dma.done [#allocation9], 2048
    $region17: #{tpu_custom_call.1} parent=1 // pred_fallthru
      _
    %s58 = sadd.s32 0, 0
    %s59 = smul.u32 %s58, 128
    %s60 = sadd.s32 %s59, 0
    %s61 = sld [smem:[#allocation3 + %s60]]
    %s62 = smul.u32 2, %s61
    %s63 = sadd.s32 0, 0
    %s64 = smul.u32 %s63, 128
    %s65 = sadd.s32 %s64, 0
    %s66 = sld [smem:[#allocation3 + %s65]]
    %s67 = smul.u32 32, %s66
    %p69 = scmp.eq.s32.totalorder 0, 0
    // Predicated region
    $region18: #{tpu_custom_call.1} parent=1 // pred_check
      %p70 = pneg %p69
    $region19: #{tpu_custom_call.1} parent=1 // pred_check_branch
      %72 = sbr.rel (%p70) target = $region21
    $region20: #{tpu_custom_call.1} parent=1 // pred_region
      %73 = vst [vmem:[#allocation10] sm:$0xff] 0.0
      %74 = vst [vmem:[#allocation10 + $0x8] sm:$0xff] 0.0
      %75 = vst [vmem:[#allocation10 + $0x10] sm:$0xff] 0.0
      %76 = vst [vmem:[#allocation10 + $0x18] sm:$0xff] 0.0
      %77 = vst [vmem:[#allocation10 + $0x20] sm:$0xff] 0.0
      %78 = vst [vmem:[#allocation10 + $0x28] sm:$0xff] 0.0
      %79 = vst [vmem:[#allocation10 + $0x30] sm:$0xff] 0.0
      %80 = vst [vmem:[#allocation10 + $0x38] sm:$0xff] 0.0
      %81 = vst [vmem:[#allocation10 + $0x40] sm:$0xff] 0.0
      %82 = vst [vmem:[#allocation10 + $0x48] sm:$0xff] 0.0
      %83 = vst [vmem:[#allocation10 + $0x50] sm:$0xff] 0.0
      %84 = vst [vmem:[#allocation10 + $0x58] sm:$0xff] 0.0
      %85 = vst [vmem:[#allocation10 + $0x60] sm:$0xff] 0.0
      %86 = vst [vmem:[#allocation10 + $0x68] sm:$0xff] 0.0
      %87 = vst [vmem:[#allocation10 + $0x70] sm:$0xff] 0.0
      %88 = vst [vmem:[#allocation10 + $0x78] sm:$0xff] 0.0
      %89 = vst [vmem:[#allocation10 + $0x80] sm:$0xff] 0.0
      %90 = vst [vmem:[#allocation10 + $0x88] sm:$0xff] 0.0
      %91 = vst [vmem:[#allocation10 + $0x90] sm:$0xff] 0.0
      %92 = vst [vmem:[#allocation10 + $0x98] sm:$0xff] 0.0
      %93 = vst [vmem:[#allocation10 + $0xa0] sm:$0xff] 0.0
      %94 = vst [vmem:[#allocation10 + $0xa8] sm:$0xff] 0.0
      %95 = vst [vmem:[#allocation10 + $0xb0] sm:$0xff] 0.0
      %96 = vst [vmem:[#allocation10 + $0xb8] sm:$0xff] 0.0
      %97 = vst [vmem:[#allocation10 + $0xc0] sm:$0xff] 0.0
      %98 = vst [vmem:[#allocation10 + $0xc8] sm:$0xff] 0.0
      %99 = vst [vmem:[#allocation10 + $0xd0] sm:$0xff] 0.0
      %100 = vst [vmem:[#allocation10 + $0xd8] sm:$0xff] 0.0
      %101 = vst [vmem:[#allocation10 + $0xe0] sm:$0xff] 0.0
      %102 = vst [vmem:[#allocation10 + $0xe8] sm:$0xff] 0.0
      %103 = vst [vmem:[#allocation10 + $0xf0] sm:$0xff] 0.0
      %104 = vst [vmem:[#allocation10 + $0xf8] sm:$0xff] 0.0
    $region21: #{tpu_custom_call.1} parent=1 // pred_fallthru
      _
    %s105 = sld [smem:[#allocation4]]
    %p106 = scmp.lt.s32.totalorder 0, %s105
    // Predicated region
    $region22: #{tpu_custom_call.1} parent=1 // pred_check
      %p107 = pneg %p106
    $region23: #{tpu_custom_call.1} parent=1 // pred_check_branch
      %109 = sbr.rel (%p107) target = $region25
    $region24: #{tpu_custom_call.1} parent=1 // pred_region
      %v110 = vld [vmem:[#allocation10] sm:$0xff]
      %v111 = vld [vmem:[#allocation10 + $0x8] sm:$0xff]
      %v112 = vld [vmem:[#allocation10 + $0x10] sm:$0xff]
      %v113 = vld [vmem:[#allocation10 + $0x18] sm:$0xff]
      %v114 = vld [vmem:[#allocation10 + $0x20] sm:$0xff]
      %v115 = vld [vmem:[#allocation10 + $0x28] sm:$0xff]
      %v116 = vld [vmem:[#allocation10 + $0x30] sm:$0xff]
      %v117 = vld [vmem:[#allocation10 + $0x38] sm:$0xff]
      %v118 = vld [vmem:[#allocation10 + $0x40] sm:$0xff]
      %v119 = vld [vmem:[#allocation10 + $0x48] sm:$0xff]
      %v120 = vld [vmem:[#allocation10 + $0x50] sm:$0xff]
      %v121 = vld [vmem:[#allocation10 + $0x58] sm:$0xff]
      %v122 = vld [vmem:[#allocation10 + $0x60] sm:$0xff]
      %v123 = vld [vmem:[#allocation10 + $0x68] sm:$0xff]
      %v124 = vld [vmem:[#allocation10 + $0x70] sm:$0xff]
      %v125 = vld [vmem:[#allocation10 + $0x78] sm:$0xff]
      %v126 = vld [vmem:[#allocation10 + $0x80] sm:$0xff]
      %v127 = vld [vmem:[#allocation10 + $0x88] sm:$0xff]
      %v128 = vld [vmem:[#allocation10 + $0x90] sm:$0xff]
      %v129 = vld [vmem:[#allocation10 + $0x98] sm:$0xff]
      %v130 = vld [vmem:[#allocation10 + $0xa0] sm:$0xff]
      %v131 = vld [vmem:[#allocation10 + $0xa8] sm:$0xff]
      %v132 = vld [vmem:[#allocation10 + $0xb0] sm:$0xff]
      %v133 = vld [vmem:[#allocation10 + $0xb8] sm:$0xff]
      %v134 = vld [vmem:[#allocation10 + $0xc0] sm:$0xff]
      %v135 = vld [vmem:[#allocation10 + $0xc8] sm:$0xff]
      %v136 = vld [vmem:[#allocation10 + $0xd0] sm:$0xff]
      %v137 = vld [vmem:[#allocation10 + $0xd8] sm:$0xff]
      %v138 = vld [vmem:[#allocation10 + $0xe0] sm:$0xff]
      %v139 = vld [vmem:[#allocation10 + $0xe8] sm:$0xff]
      %v140 = vld [vmem:[#allocation10 + $0xf0] sm:$0xff]
      %v141 = vld [vmem:[#allocation10 + $0xf8] sm:$0xff]
      %v142 = vld [vmem:[#allocation5] sm:$0xff]
      %v143 = vld [vmem:[#allocation5 + $0x8] sm:$0xff]
      %v144 = vld [vmem:[#allocation5 + $0x10] sm:$0xff]
      %v145 = vld [vmem:[#allocation5 + $0x18] sm:$0xff]
      %v146 = vld [vmem:[#allocation5 + $0x20] sm:$0xff]
      %v147 = vld [vmem:[#allocation5 + $0x28] sm:$0xff]
      %v148 = vld [vmem:[#allocation5 + $0x30] sm:$0xff]
      %v149 = vld [vmem:[#allocation5 + $0x38] sm:$0xff]
      %v150 = vld [vmem:[#allocation5 + $0x40] sm:$0xff]
      %v151 = vld [vmem:[#allocation5 + $0x48] sm:$0xff]
      %v152 = vld [vmem:[#allocation5 + $0x50] sm:$0xff]
      %v153 = vld [vmem:[#allocation5 + $0x58] sm:$0xff]
      %v154 = vld [vmem:[#allocation5 + $0x60] sm:$0xff]
      %v155 = vld [vmem:[#allocation5 + $0x68] sm:$0xff]
      %v156 = vld [vmem:[#allocation5 + $0x70] sm:$0xff]
      %v157 = vld [vmem:[#allocation5 + $0x78] sm:$0xff]
      %v158 = vld [vmem:[#allocation5 + $0x80] sm:$0xff]
      %v159 = vld [vmem:[#allocation5 + $0x88] sm:$0xff]
      %v160 = vld [vmem:[#allocation5 + $0x90] sm:$0xff]
      %v161 = vld [vmem:[#allocation5 + $0x98] sm:$0xff]
      %v162 = vld [vmem:[#allocation5 + $0xa0] sm:$0xff]
      %v163 = vld [vmem:[#allocation5 + $0xa8] sm:$0xff]
      %v164 = vld [vmem:[#allocation5 + $0xb0] sm:$0xff]
      %v165 = vld [vmem:[#allocation5 + $0xb8] sm:$0xff]
      %v166 = vld [vmem:[#allocation5 + $0xc0] sm:$0xff]
      %v167 = vld [vmem:[#allocation5 + $0xc8] sm:$0xff]
      %v168 = vld [vmem:[#allocation5 + $0xd0] sm:$0xff]
      %v169 = vld [vmem:[#allocation5 + $0xd8] sm:$0xff]
      %v170 = vld [vmem:[#allocation5 + $0xe0] sm:$0xff]
      %v171 = vld [vmem:[#allocation5 + $0xe8] sm:$0xff]
      %v172 = vld [vmem:[#allocation5 + $0xf0] sm:$0xff]
      %v173 = vld [vmem:[#allocation5 + $0xf8] sm:$0xff]
      %v174 = vld [vmem:[#allocation8] sm:$0xf]
      %v175 = vld [vmem:[#allocation8 + $0x4] sm:$0xf]
      %v176 = vld [vmem:[#allocation8 + $0x8] sm:$0xf]
      %v177 = vld [vmem:[#allocation8 + $0xc] sm:$0xf]
      %v178 = vld [vmem:[#allocation8 + $0x10] sm:$0xf]
      %v179 = vld [vmem:[#allocation8 + $0x14] sm:$0xf]
      %v180 = vld [vmem:[#allocation8 + $0x18] sm:$0xf]
      %v181 = vld [vmem:[#allocation8 + $0x1c] sm:$0xf]
      %v182 = vld [vmem:[#allocation8 + $0x20] sm:$0xf]
      %v183 = vld [vmem:[#allocation8 + $0x24] sm:$0xf]
      %v184 = vld [vmem:[#allocation8 + $0x28] sm:$0xf]
      %v185 = vld [vmem:[#allocation8 + $0x2c] sm:$0xf]
      %v186 = vld [vmem:[#allocation8 + $0x30] sm:$0xf]
      %v187 = vld [vmem:[#allocation8 + $0x34] sm:$0xf]
      %v188 = vld [vmem:[#allocation8 + $0x38] sm:$0xf]
      %v189 = vld [vmem:[#allocation8 + $0x3c] sm:$0xf]
      %v190 = vld [vmem:[#allocation8 + $0x40] sm:$0xf]
      %v191 = vld [vmem:[#allocation8 + $0x44] sm:$0xf]
      %v192 = vld [vmem:[#allocation8 + $0x48] sm:$0xf]
      %v193 = vld [vmem:[#allocation8 + $0x4c] sm:$0xf]
      %v194 = vld [vmem:[#allocation8 + $0x50] sm:$0xf]
      %v195 = vld [vmem:[#allocation8 + $0x54] sm:$0xf]
      %v196 = vld [vmem:[#allocation8 + $0x58] sm:$0xf]
      %v197 = vld [vmem:[#allocation8 + $0x5c] sm:$0xf]
      %v198 = vld [vmem:[#allocation8 + $0x60] sm:$0xf]
      %v199 = vld [vmem:[#allocation8 + $0x64] sm:$0xf]
      %v200 = vld [vmem:[#allocation8 + $0x68] sm:$0xf]
      %v201 = vld [vmem:[#allocation8 + $0x6c] sm:$0xf]
      %v202 = vld [vmem:[#allocation8 + $0x70] sm:$0xf]
      %v203 = vld [vmem:[#allocation8 + $0x74] sm:$0xf]
      %v204 = vld [vmem:[#allocation8 + $0x78] sm:$0xf]
      %v205 = vld [vmem:[#allocation8 + $0x7c] sm:$0xf]
      %v238 = vunpack.c.l.b16 %v142
      %v239 = vunpack.c.h.b16 %v142
      %v240 = vunpack.c.l.b16 %v143
      %v241 = vunpack.c.h.b16 %v143
      %v242 = vunpack.c.l.b16 %v144
      %v243 = vunpack.c.h.b16 %v144
      %v244 = vunpack.c.l.b16 %v145
      %v245 = vunpack.c.h.b16 %v145
      %v246 = vunpack.c.l.b16 %v146
      %v247 = vunpack.c.h.b16 %v146
      %v248 = vunpack.c.l.b16 %v147
      %v249 = vunpack.c.h.b16 %v147
      %v250 = vunpack.c.l.b16 %v148
      %v251 = vunpack.c.h.b16 %v148
      %v252 = vunpack.c.l.b16 %v149
      %v253 = vunpack.c.h.b16 %v149
      %v254 = vunpack.c.l.b16 %v150
      %v255 = vunpack.c.h.b16 %v150
      %v256 = vunpack.c.l.b16 %v151
      %v257 = vunpack.c.h.b16 %v151
      %v258 = vunpack.c.l.b16 %v152
      %v259 = vunpack.c.h.b16 %v152
      %v260 = vunpack.c.l.b16 %v153
      %v261 = vunpack.c.h.b16 %v153
      %v262 = vunpack.c.l.b16 %v154
      %v263 = vunpack.c.h.b16 %v154
      %v264 = vunpack.c.l.b16 %v155
      %v265 = vunpack.c.h.b16 %v155
      %v266 = vunpack.c.l.b16 %v156
      %v267 = vunpack.c.h.b16 %v156
      %v268 = vunpack.c.l.b16 %v157
      %v269 = vunpack.c.h.b16 %v157
      %v270 = vunpack.c.l.b16 %v158
      %v271 = vunpack.c.h.b16 %v158
      %v272 = vunpack.c.l.b16 %v159
      %v273 = vunpack.c.h.b16 %v159
      %v274 = vunpack.c.l.b16 %v160
      %v275 = vunpack.c.h.b16 %v160
      %v276 = vunpack.c.l.b16 %v161
      %v277 = vunpack.c.h.b16 %v161
      %v278 = vunpack.c.l.b16 %v162
      %v279 = vunpack.c.h.b16 %v162
      %v280 = vunpack.c.l.b16 %v163
      %v281 = vunpack.c.h.b16 %v163
      %v282 = vunpack.c.l.b16 %v164
      %v283 = vunpack.c.h.b16 %v164
      %v284 = vunpack.c.l.b16 %v165
      %v285 = vunpack.c.h.b16 %v165
      %v286 = vunpack.c.l.b16 %v166
      %v287 = vunpack.c.h.b16 %v166
      %v288 = vunpack.c.l.b16 %v167
      %v289 = vunpack.c.h.b16 %v167
      %v290 = vunpack.c.l.b16 %v168
      %v291 = vunpack.c.h.b16 %v168
      %v292 = vunpack.c.l.b16 %v169
      %v293 = vunpack.c.h.b16 %v169
      %v294 = vunpack.c.l.b16 %v170
      %v295 = vunpack.c.h.b16 %v170
      %v296 = vunpack.c.l.b16 %v171
      %v297 = vunpack.c.h.b16 %v171
      %v298 = vunpack.c.l.b16 %v172
      %v299 = vunpack.c.h.b16 %v172
      %v300 = vunpack.c.l.b16 %v173
      %v301 = vunpack.c.h.b16 %v173
      %v302 = vpack.c.b16 %v240, %v238
      %v303 = vpack.c.b16 %v241, %v239
      %v304 = vpack.c.b16 %v244, %v242
      %v305 = vpack.c.b16 %v245, %v243
      %v306 = vpack.c.b16 %v248, %v246
      %v307 = vpack.c.b16 %v249, %v247
      %v308 = vpack.c.b16 %v252, %v250
      %v309 = vpack.c.b16 %v253, %v251
      %v310 = vpack.c.b16 %v256, %v254
      %v311 = vpack.c.b16 %v257, %v255
      %v312 = vpack.c.b16 %v260, %v258
      %v313 = vpack.c.b16 %v261, %v259
      %v314 = vpack.c.b16 %v264, %v262
      %v315 = vpack.c.b16 %v265, %v263
      %v316 = vpack.c.b16 %v268, %v266
      %v317 = vpack.c.b16 %v269, %v267
      %v318 = vpack.c.b16 %v272, %v270
      %v319 = vpack.c.b16 %v273, %v271
      %v320 = vpack.c.b16 %v276, %v274
      %v321 = vpack.c.b16 %v277, %v275
      %v322 = vpack.c.b16 %v280, %v278
      %v323 = vpack.c.b16 %v281, %v279
      %v324 = vpack.c.b16 %v284, %v282
      %v325 = vpack.c.b16 %v285, %v283
      %v326 = vpack.c.b16 %v288, %v286
      %v327 = vpack.c.b16 %v289, %v287
      %v328 = vpack.c.b16 %v292, %v290
      %v329 = vpack.c.b16 %v293, %v291
      %v330 = vpack.c.b16 %v296, %v294
      %v331 = vpack.c.b16 %v297, %v295
      %v332 = vpack.c.b16 %v300, %v298
      %v333 = vpack.c.b16 %v301, %v299
      %v398 = vunpack.c.l.b16 %v174
      %v399 = vunpack.c.l.b16 %v175
      %v400 = vunpack.c.l.b16 %v176
      %v401 = vunpack.c.l.b16 %v177
      %v402 = vunpack.c.l.b16 %v178
      %v403 = vunpack.c.l.b16 %v179
      %v404 = vunpack.c.l.b16 %v180
      %v405 = vunpack.c.l.b16 %v181
      %v406 = vunpack.c.l.b16 %v182
      %v407 = vunpack.c.l.b16 %v183
      %v408 = vunpack.c.l.b16 %v184
      %v409 = vunpack.c.l.b16 %v185
      %v410 = vunpack.c.l.b16 %v186
      %v411 = vunpack.c.l.b16 %v187
      %v412 = vunpack.c.l.b16 %v188
      %v413 = vunpack.c.l.b16 %v189
      %v414 = vunpack.c.l.b16 %v190
      %v415 = vunpack.c.l.b16 %v191
      %v416 = vunpack.c.l.b16 %v192
      %v417 = vunpack.c.l.b16 %v193
      %v418 = vunpack.c.l.b16 %v194
      %v419 = vunpack.c.l.b16 %v195
      %v420 = vunpack.c.l.b16 %v196
      %v421 = vunpack.c.l.b16 %v197
      %v422 = vunpack.c.l.b16 %v198
      %v423 = vunpack.c.l.b16 %v199
      %v424 = vunpack.c.l.b16 %v200
      %v425 = vunpack.c.l.b16 %v201
      %v426 = vunpack.c.l.b16 %v202
      %v427 = vunpack.c.l.b16 %v203
      %v428 = vunpack.c.l.b16 %v204
      %v429 = vunpack.c.l.b16 %v205
      %v430 = vpack.c.b16 %v399, %v398
      %v431 = vpack.c.b16 %v401, %v400
      %v432 = vpack.c.b16 %v403, %v402
      %v433 = vpack.c.b16 %v405, %v404
      %v434 = vpack.c.b16 %v407, %v406
      %v435 = vpack.c.b16 %v409, %v408
      %v436 = vpack.c.b16 %v411, %v410
      %v437 = vpack.c.b16 %v413, %v412
      %v438 = vpack.c.b16 %v415, %v414
      %v439 = vpack.c.b16 %v417, %v416
      %v440 = vpack.c.b16 %v419, %v418
      %v441 = vpack.c.b16 %v421, %v420
      %v442 = vpack.c.b16 %v423, %v422
      %v443 = vpack.c.b16 %v425, %v424
      %v444 = vpack.c.b16 %v427, %v426
      %v445 = vpack.c.b16 %v429, %v428
      %462 = vmatprep.subr.bf16.mxu0 0
      %463 = vmatpush1.bf16.msra.mxu0 %v437
      %464 = vmatprep.subr.bf16.mxu0 0
      %465 = vmatpush1.bf16.msra.mxu0 %v436
      %466 = vmatprep.subr.bf16.mxu0 0
      %467 = vmatpush1.bf16.msra.mxu0 %v435
      %468 = vmatprep.subr.bf16.mxu0 0
      %469 = vmatpush1.bf16.msra.mxu0 %v434
      %470 = vmatprep.subr.bf16.mxu0 0
      %471 = vmatpush1.bf16.msra.mxu0 %v433
      %472 = vmatprep.subr.bf16.mxu0 0
      %473 = vmatpush1.bf16.msra.mxu0 %v432
      %474 = vmatprep.subr.bf16.mxu0 0
      %475 = vmatpush1.bf16.msra.mxu0 %v431
      %476 = vmatprep.subr.bf16.mxu0 0
      %477 = vmatpush1.bf16.msra.mxu0 %v430
      %478 = vmatprep.subr.bf16.mxu0 0
      %479 = vmatpush2.bf16.msra.mxu0 %v445
      %480 = vmatprep.subr.bf16.mxu0 0
      %481 = vmatpush2.bf16.msra.mxu0 %v444
      %482 = vmatprep.subr.bf16.mxu0 0
      %483 = vmatpush2.bf16.msra.mxu0 %v443
      %484 = vmatprep.subr.bf16.mxu0 0
      %485 = vmatpush2.bf16.msra.mxu0 %v442
      %486 = vmatprep.subr.bf16.mxu0 0
      %487 = vmatpush2.bf16.msra.mxu0 %v441
      %488 = vmatprep.subr.bf16.mxu0 0
      %489 = vmatpush2.bf16.msra.mxu0 %v440
      %490 = vmatprep.subr.bf16.mxu0 0
      %491 = vmatpush2.bf16.msra.mxu0 %v439
      %492 = vmatprep.subr.bf16.mxu0 0
      %493 = vmatpush2.bf16.msra.mxu0 %v438
      %494 = vmatprep.mubr.bf16.mxu0 %v303
      %495 = vmatmul.mubr.bf16.gmra.mxu0 %v302
      %v496 = vpop.f32.mrf.mxu0
      %v497 = vadd.f32 0.0, %v496
      %v498 = vpop.f32.mrf.mxu0
      %v499 = vpop.f32.mrf.mxu0
      %v500 = vadd.f32 0.0, %v499
      %v501 = vpop.f32.mrf.mxu0
      %502 = vmatprep.mubr.bf16.mxu0 %v305
      %503 = vmatmul.mubr.bf16.gmra.mxu0 %v304
      %v504 = vpop.f32.mrf.mxu0
      %v505 = vadd.f32 0.0, %v504
      %v506 = vpop.f32.mrf.mxu0
      %v507 = vpop.f32.mrf.mxu0
      %v508 = vadd.f32 0.0, %v507
      %v509 = vpop.f32.mrf.mxu0
      %510 = vmatprep.mubr.bf16.mxu0 %v307
      %511 = vmatmul.mubr.bf16.gmra.mxu0 %v306
      %v512 = vpop.f32.mrf.mxu0
      %v513 = vadd.f32 0.0, %v512
      %v514 = vpop.f32.mrf.mxu0
      %v515 = vpop.f32.mrf.mxu0
      %v516 = vadd.f32 0.0, %v515
      %v517 = vpop.f32.mrf.mxu0
      %518 = vmatprep.mubr.bf16.mxu0 %v309
      %519 = vmatmul.mubr.bf16.gmra.mxu0 %v308
      %v520 = vpop.f32.mrf.mxu0
      %v521 = vadd.f32 0.0, %v520
      %v522 = vpop.f32.mrf.mxu0
      %v523 = vpop.f32.mrf.mxu0
      %v524 = vadd.f32 0.0, %v523
      %v525 = vpop.f32.mrf.mxu0
      %526 = vmatprep.mubr.bf16.mxu0 %v311
      %527 = vmatmul.mubr.bf16.gmra.mxu0 %v310
      %v528 = vpop.f32.mrf.mxu0
      %v529 = vadd.f32 0.0, %v528
      %v530 = vpop.f32.mrf.mxu0
      %v531 = vpop.f32.mrf.mxu0
      %v532 = vadd.f32 0.0, %v531
      %v533 = vpop.f32.mrf.mxu0
      %534 = vmatprep.mubr.bf16.mxu0 %v313
      %535 = vmatmul.mubr.bf16.gmra.mxu0 %v312
      %v536 = vpop.f32.mrf.mxu0
      %v537 = vadd.f32 0.0, %v536
      %v538 = vpop.f32.mrf.mxu0
      %v539 = vpop.f32.mrf.mxu0
      %v540 = vadd.f32 0.0, %v539
      %v541 = vpop.f32.mrf.mxu0
      %542 = vmatprep.mubr.bf16.mxu0 %v315
      %543 = vmatmul.mubr.bf16.gmra.mxu0 %v314
      %v544 = vpop.f32.mrf.mxu0
      %v545 = vadd.f32 0.0, %v544
      %v546 = vpop.f32.mrf.mxu0
      %v547 = vpop.f32.mrf.mxu0
      %v548 = vadd.f32 0.0, %v547
      %v549 = vpop.f32.mrf.mxu0
      %550 = vmatprep.mubr.bf16.mxu0 %v317
      %551 = vmatmul.mubr.bf16.gmra.mxu0 %v316
      %v552 = vpop.f32.mrf.mxu0
      %v553 = vadd.f32 0.0, %v552
      %v554 = vpop.f32.mrf.mxu0
      %v555 = vpop.f32.mrf.mxu0
      %v556 = vadd.f32 0.0, %v555
      %v557 = vpop.f32.mrf.mxu0
      %558 = vmatprep.mubr.bf16.mxu0 %v319
      %559 = vmatmul.mubr.bf16.gmra.mxu0 %v318
      %v560 = vpop.f32.mrf.mxu0
      %v561 = vadd.f32 0.0, %v560
      %v562 = vpop.f32.mrf.mxu0
      %v563 = vpop.f32.mrf.mxu0
      %v564 = vadd.f32 0.0, %v563
      %v565 = vpop.f32.mrf.mxu0
      %566 = vmatprep.mubr.bf16.mxu0 %v321
      %567 = vmatmul.mubr.bf16.gmra.mxu0 %v320
      %v568 = vpop.f32.mrf.mxu0
      %v569 = vadd.f32 0.0, %v568
      %v570 = vpop.f32.mrf.mxu0
      %v571 = vpop.f32.mrf.mxu0
      %v572 = vadd.f32 0.0, %v571
      %v573 = vpop.f32.mrf.mxu0
      %574 = vmatprep.mubr.bf16.mxu0 %v323
      %575 = vmatmul.mubr.bf16.gmra.mxu0 %v322
      %v576 = vpop.f32.mrf.mxu0
      %v577 = vadd.f32 0.0, %v576
      %v578 = vpop.f32.mrf.mxu0
      %v579 = vpop.f32.mrf.mxu0
      %v580 = vadd.f32 0.0, %v579
      %v581 = vpop.f32.mrf.mxu0
      %582 = vmatprep.mubr.bf16.mxu0 %v325
      %583 = vmatmul.mubr.bf16.gmra.mxu0 %v324
      %v584 = vpop.f32.mrf.mxu0
      %v585 = vadd.f32 0.0, %v584
      %v586 = vpop.f32.mrf.mxu0
      %v587 = vpop.f32.mrf.mxu0
      %v588 = vadd.f32 0.0, %v587
      %v589 = vpop.f32.mrf.mxu0
      %590 = vmatprep.mubr.bf16.mxu0 %v327
      %591 = vmatmul.mubr.bf16.gmra.mxu0 %v326
      %v592 = vpop.f32.mrf.mxu0
      %v593 = vadd.f32 0.0, %v592
      %v594 = vpop.f32.mrf.mxu0
      %v595 = vpop.f32.mrf.mxu0
      %v596 = vadd.f32 0.0, %v595
      %v597 = vpop.f32.mrf.mxu0
      %598 = vmatprep.mubr.bf16.mxu0 %v329
      %599 = vmatmul.mubr.bf16.gmra.mxu0 %v328
      %v600 = vpop.f32.mrf.mxu0
      %v601 = vadd.f32 0.0, %v600
      %v602 = vpop.f32.mrf.mxu0
      %v603 = vpop.f32.mrf.mxu0
      %v604 = vadd.f32 0.0, %v603
      %v605 = vpop.f32.mrf.mxu0
      %606 = vmatprep.mubr.bf16.mxu0 %v331
      %607 = vmatmul.mubr.bf16.gmra.mxu0 %v330
      %v608 = vpop.f32.mrf.mxu0
      %v609 = vadd.f32 0.0, %v608
      %v610 = vpop.f32.mrf.mxu0
      %v611 = vpop.f32.mrf.mxu0
      %v612 = vadd.f32 0.0, %v611
      %v613 = vpop.f32.mrf.mxu0
      %614 = vmatprep.mubr.bf16.mxu0 %v333
      %615 = vmatmul.mubr.bf16.gmra.mxu0 %v332
      %v616 = vpop.f32.mrf.mxu0
      %v617 = vadd.f32 0.0, %v616
      %v618 = vpop.f32.mrf.mxu0
      %v619 = vpop.f32.mrf.mxu0
      %v620 = vadd.f32 0.0, %v619
      %v621 = vpop.f32.mrf.mxu0
      %622 = vdwg.mxu0
      %v623 = vadd.f32 %v110, %v497
      %v624 = vadd.f32 %v111, %v500
      %v625 = vadd.f32 %v112, %v505
      %v626 = vadd.f32 %v113, %v508
      %v627 = vadd.f32 %v114, %v513
      %v628 = vadd.f32 %v115, %v516
      %v629 = vadd.f32 %v116, %v521
      %v630 = vadd.f32 %v117, %v524
      %v631 = vadd.f32 %v118, %v529
      %v632 = vadd.f32 %v119, %v532
      %v633 = vadd.f32 %v120, %v537
      %v634 = vadd.f32 %v121, %v540
      %v635 = vadd.f32 %v122, %v545
      %v636 = vadd.f32 %v123, %v548
      %v637 = vadd.f32 %v124, %v553
      %v638 = vadd.f32 %v125, %v556
      %v639 = vadd.f32 %v126, %v561
      %v640 = vadd.f32 %v127, %v564
      %v641 = vadd.f32 %v128, %v569
      %v642 = vadd.f32 %v129, %v572
      %v643 = vadd.f32 %v130, %v577
      %v644 = vadd.f32 %v131, %v580
      %v645 = vadd.f32 %v132, %v585
      %v646 = vadd.f32 %v133, %v588
      %v647 = vadd.f32 %v134, %v593
      %v648 = vadd.f32 %v135, %v596
      %v649 = vadd.f32 %v136, %v601
      %v650 = vadd.f32 %v137, %v604
      %v651 = vadd.f32 %v138, %v609
      %v652 = vadd.f32 %v139, %v612
      %v653 = vadd.f32 %v140, %v617
      %v654 = vadd.f32 %v141, %v620
      %655 = vst [vmem:[#allocation10] sm:$0xff] %v623
      %656 = vst [vmem:[#allocation10 + $0x8] sm:$0xff] %v624
      %657 = vst [vmem:[#allocation10 + $0x10] sm:$0xff] %v625
      %658 = vst [vmem:[#allocation10 + $0x18] sm:$0xff] %v626
      %659 = vst [vmem:[#allocation10 + $0x20] sm:$0xff] %v627
      %660 = vst [vmem:[#allocation10 + $0x28] sm:$0xff] %v628
      %661 = vst [vmem:[#allocation10 + $0x30] sm:$0xff] %v629
      %662 = vst [vmem:[#allocation10 + $0x38] sm:$0xff] %v630
      %663 = vst [vmem:[#allocation10 + $0x40] sm:$0xff] %v631
      %664 = vst [vmem:[#allocation10 + $0x48] sm:$0xff] %v632
      %665 = vst [vmem:[#allocation10 + $0x50] sm:$0xff] %v633
      %666 = vst [vmem:[#allocation10 + $0x58] sm:$0xff] %v634
      %667 = vst [vmem:[#allocation10 + $0x60] sm:$0xff] %v635
      %668 = vst [vmem:[#allocation10 + $0x68] sm:$0xff] %v636
      %669 = vst [vmem:[#allocation10 + $0x70] sm:$0xff] %v637
      %670 = vst [vmem:[#allocation10 + $0x78] sm:$0xff] %v638
      %671 = vst [vmem:[#allocation10 + $0x80] sm:$0xff] %v639
      %672 = vst [vmem:[#allocation10 + $0x88] sm:$0xff] %v640
      %673 = vst [vmem:[#allocation10 + $0x90] sm:$0xff] %v641
      %674 = vst [vmem:[#allocation10 + $0x98] sm:$0xff] %v642
      %675 = vst [vmem:[#allocation10 + $0xa0] sm:$0xff] %v643
      %676 = vst [vmem:[#allocation10 + $0xa8] sm:$0xff] %v644
      %677 = vst [vmem:[#allocation10 + $0xb0] sm:$0xff] %v645
      %678 = vst [vmem:[#allocation10 + $0xb8] sm:$0xff] %v646
      %679 = vst [vmem:[#allocation10 + $0xc0] sm:$0xff] %v647
      %680 = vst [vmem:[#allocation10 + $0xc8] sm:$0xff] %v648
      %681 = vst [vmem:[#allocation10 + $0xd0] sm:$0xff] %v649
      %682 = vst [vmem:[#allocation10 + $0xd8] sm:$0xff] %v650
      %683 = vst [vmem:[#allocation10 + $0xe0] sm:$0xff] %v651
      %684 = vst [vmem:[#allocation10 + $0xe8] sm:$0xff] %v652
      %685 = vst [vmem:[#allocation10 + $0xf0] sm:$0xff] %v653
      %686 = vst [vmem:[#allocation10 + $0xf8] sm:$0xff] %v654
    $region25: #{tpu_custom_call.1} parent=1 // pred_fallthru
      _
    // Predicated region
    $region26: #{tpu_custom_call.1} parent=1 // pred_check
      _
    $region27: #{tpu_custom_call.1} parent=1 // pred_check_branch
      %688 = sbr.rel (0) target = $region29
    $region28: #{tpu_custom_call.1} parent=1 // pred_region
      %s690 = ssub.s32 4096, 4096
      %691 = vsyncadd [#allocation7], %s690
      %s692 = sshll.u32 [#allocation10], 4
      %s693 = int_to_ptr.vmem [resolvable:$true] %s692
      %698 = dma.vmem_to_hbm [thread:$0]  %s693, 4096, %s4, [#allocation7], 128, 128, 8
    $region29: #{tpu_custom_call.1} parent=1 // pred_fallthru
      _
    // Predicated region
    $region30: #{tpu_custom_call.1} parent=1 // pred_check
      _
    $region31: #{tpu_custom_call.1} parent=1 // pred_check_branch
      %700 = sbr.rel (0) target = $region33
    $region32: #{tpu_custom_call.1} parent=1 // pred_region
      %701 = dma.done [#allocation7], 4096
    $region33: #{tpu_custom_call.1} parent=1 // pred_fallthru
      _
    %702 = vsyncpa [#allocation6], 1
    %703 = vsyncpa [#allocation9], 1
    %704 = vsyncpa [#allocation7], 1

</llo_original>
